<compile_context>
chip_gen: v5e
topology: v5e:2x2
jax: 0.10.0
libtpu: 0.0.40
codegen_flags: <defaults>
</compile_context>

<pallas_src>
import functools

import jax
import jax.numpy as jnp
import numpy as np
from jax import lax
from jax.experimental import pallas as pl
from jax.experimental.pallas import tpu as pltpu


def _ggnn_kernel(x_ref, a_ref, w_ref, bz_ref, br_ref, bh_ref, o_ref,
                 *, time_step, n):
    # x_ref : (1, N, D) f32   node states for this batch element
    # a_ref : (2N, N)  bf16   [A_in ; A_out] stacked along rows (shared)
    # w_ref : (8, D, D) bf16  [w3a,w3b,u3, w4a,w4b, w5a,w5b, u5] pre-transposed
    # b*_ref: (1, D)   f32    pre-folded biases (z: b3+ub3, r: b4+ub3, h: b5+ub5)
    a_stack = a_ref[...]
    # D is tiny here, so hoisting the weight loads out of the time loop is fine;
    # at large D read them inside the loop body to bound vreg live ranges.
    w3a, w3b, u3 = w_ref[0], w_ref[1], w_ref[2]
    w4a, w4b = w_ref[3], w_ref[4]
    w5a, w5b, u5 = w_ref[5], w_ref[6], w_ref[7]
    bz, br, bh = bz_ref[...], br_ref[...], bh_ref[...]

    def step(nodes):
        nb = nodes.astype(jnp.bfloat16)
        # Adjacency propagation: one dot yields [ag_in; ag_out]; the f32 row
        # split at offset n (multiple of 8) is sublane-aligned, no relayout.
        ag = jnp.dot(a_stack, nb, preferred_element_type=jnp.float32)   # (2N, D)
        ag_in = ag[:n].astype(jnp.bfloat16)
        ag_out = ag[n:].astype(jnp.bfloat16)

        # Shared fc_eq3_u(x) term (used by both z and r — reference behavior).
        u3n = jnp.dot(nb, u3, preferred_element_type=jnp.float32)

        z_pre = (jnp.dot(ag_in, w3a, preferred_element_type=jnp.float32)
                 + jnp.dot(ag_out, w3b, preferred_element_type=jnp.float32)
                 + u3n + bz)
        r_pre = (jnp.dot(ag_in, w4a, preferred_element_type=jnp.float32)
                 + jnp.dot(ag_out, w4b, preferred_element_type=jnp.float32)
                 + u3n + br)                       # fc_eq3_u reused (bug repro)
        zv = jax.nn.sigmoid(z_pre)
        rv = jax.nn.sigmoid(r_pre)

        h_pre = (jnp.dot(ag_in, w5a, preferred_element_type=jnp.float32)
                 + jnp.dot(ag_out, w5b, preferred_element_type=jnp.float32)
                 + jnp.dot((rv * nodes).astype(jnp.bfloat16), u5,
                           preferred_element_type=jnp.float32)
                 + bh)
        hv = jnp.tanh(h_pre)
        return (1.0 - zv) * nodes + zv * hv

    nodes = x_ref[0]                                # (N, D) f32
    if time_step <= 8:
        for _ in range(time_step):                  # small static unroll
            nodes = step(nodes)
    else:                                           # bound live ranges at large T
        nodes = lax.fori_loop(0, time_step, lambda _, v: step(v), nodes,
                              unroll=2)
    o_ref[0] = nodes


def ggnn_forward(x, in_matrix, out_matrix, params, time_step):
    """x: (B, N, D) f32. Returns (B, N, D) f32."""
    B, N, D = x.shape
    (w3, b3, u3, ub3, w4, b4, w5, b5, u5, ub5) = params

    # PyTorch Linear: y = x @ W.T + b with W of shape (out, in). Pre-transpose.
    w3t, w4t, w5t = w3.T, w4.T, w5.T               # (2D, D) each
    u3t, u5t = u3.T, u5.T                          # (D, D)

    # Per-gate (D, D) weight blocks packed into one slab; MXU operands in bf16.
    w_stack = jnp.stack(
        [w3t[:D], w3t[D:], u3t,                    # z gate
         w4t[:D], w4t[D:],                         # r gate (u-term reuses u3)
         w5t[:D], w5t[D:], u5t],                   # h candidate
        axis=0).astype(jnp.bfloat16)               # (8, D, D)

    # Pre-folded biases stay f32 (added to f32 accumulators).
    bz = (b3 + ub3).reshape(1, D).astype(jnp.float32)
    br = (b4 + ub3).reshape(1, D).astype(jnp.float32)   # fc_eq3_u bias reused
    bh = (b5 + ub5).reshape(1, D).astype(jnp.float32)

    # Single adjacency slab shared across the batch (no kron block-diagonal).
    a_stack = jnp.concatenate([in_matrix, out_matrix],
                              axis=0).astype(jnp.bfloat16)   # (2N, N)

    kernel = functools.partial(_ggnn_kernel, time_step=time_step, n=N)

    out = pl.pallas_call(
        kernel,
        out_shape=jax.ShapeDtypeStruct((B, N, D), jnp.float32),
        grid=(B,),                                            # batch axis
        in_specs=[
            pl.BlockSpec((1, N, D), lambda b: (b, 0, 0)),     # node states
            pl.BlockSpec((2 * N, N), lambda b: (0, 0)),       # [A_in; A_out]
            pl.BlockSpec((8, D, D), lambda b: (0, 0, 0)),     # packed weights
            pl.BlockSpec((1, D), lambda b: (0, 0)),           # z bias
            pl.BlockSpec((1, D), lambda b: (0, 0)),           # r bias
            pl.BlockSpec((1, D), lambda b: (0, 0)),           # h bias
        ],
        out_specs=pl.BlockSpec((1, N, D), lambda b: (b, 0, 0)),
        compiler_params=pltpu.CompilerParams(
            dimension_semantics=("parallel",)),               # 2nd TC on v7x
    )(x.astype(jnp.float32), a_stack, w_stack, bz, br, bh)

    return out


def ggnn_reference(x, in_matrix, out_matrix, params, time_step):
    """Pure-JAX (f32) replica of the PyTorch forward, for verification."""
    (w3, b3, u3, ub3, w4, b4, w5, b5, u5, ub5) = params
    B, N, D = x.shape
    nodes = x
    for _ in range(time_step):
        ag_in = jnp.einsum('ij,bjd->bid', in_matrix, nodes)
        ag_out = jnp.einsum('ij,bjd->bid', out_matrix, nodes)
        av = jnp.concatenate([ag_in, ag_out], axis=-1).reshape(B * N, 2 * D)
        fan = nodes.reshape(B * N, D)
        u3n = fan @ u3.T + ub3
        zv = jax.nn.sigmoid(av @ w3.T + b3 + u3n)
        rv = jax.nn.sigmoid(av @ w4.T + b4 + u3n)    # fc_eq3_u reused (bug repro)
        hv = jnp.tanh(av @ w5.T + b5 + (rv * fan) @ u5.T + ub5)
        fan = (1.0 - zv) * fan + zv * hv
        nodes = fan.reshape(B, N, D)
    return nodes


if __name__ == "__main__":
    B, N, D = 2, 8, 32        # batch, node_num, input_dim
    TIME_STEP = 3

    key = jax.random.PRNGKey(0)
    ks = jax.random.split(key, 16)

    def linear_init(kw, kb, out_dim, in_dim):
        bound = 1.0 / np.sqrt(in_dim)
        w = jax.random.uniform(kw, (out_dim, in_dim), jnp.float32, -bound, bound)
        b = jax.random.uniform(kb, (out_dim,), jnp.float32, -bound, bound)
        return w, b

    w3, b3 = linear_init(ks[0], ks[1], D, 2 * D)   # fc_eq3_w
    u3, ub3 = linear_init(ks[2], ks[3], D, D)      # fc_eq3_u
    w4, b4 = linear_init(ks[4], ks[5], D, 2 * D)   # fc_eq4_w
    # fc_eq4_u exists in the module but is unused in forward (rv uses fc_eq3_u).
    w5, b5 = linear_init(ks[6], ks[7], D, 2 * D)   # fc_eq5_w
    u5, ub5 = linear_init(ks[8], ks[9], D, D)      # fc_eq5_u
    params = (w3, b3, u3, ub3, w4, b4, w5, b5, u5, ub5)

    # Row-normalized random adjacency matrices (float, as in the demo).
    in_matrix = jax.random.uniform(ks[10], (N, N), jnp.float32)
    in_matrix = in_matrix / jnp.sum(in_matrix, axis=1, keepdims=True)
    out_matrix = jax.random.uniform(ks[11], (N, N), jnp.float32)
    out_matrix = out_matrix / jnp.sum(out_matrix, axis=1, keepdims=True)

    x = jax.random.normal(ks[12], (B, N, D), jnp.float32)

    out = ggnn_forward(x, in_matrix, out_matrix, params, TIME_STEP)
    out = jax.block_until_ready(out)

    ref = jax.block_until_ready(
        ggnn_reference(x, in_matrix, out_matrix, params, TIME_STEP))
    # Tolerance relaxed because MXU operands are bf16 (accumulation stays f32).
    np.testing.assert_allclose(np.asarray(out), np.asarray(ref),
                               rtol=2e-2, atol=5e-2)
    print("KERNEL_OK")
</pallas_src>

<mosaic_0001>
module attributes {stable_mosaic.version = 11 : i64} {
  func.func @_ggnn_kernel(%arg0: i32, %arg1: memref<1x8x32xf32, #tpu.memory_space<vmem>>, %arg2: memref<16x8xbf16, #tpu.memory_space<vmem>>, %arg3: memref<8x32x32xbf16, #tpu.memory_space<vmem>>, %arg4: memref<1x32xf32, #tpu.memory_space<vmem>>, %arg5: memref<1x32xf32, #tpu.memory_space<vmem>>, %arg6: memref<1x32xf32, #tpu.memory_space<vmem>>, %arg7: memref<1x8x32xf32, #tpu.memory_space<vmem>>) attributes {dimension_semantics = [#tpu.dimension_semantics<parallel>], iteration_bounds = array<i64: 2>, scalar_prefetch = 0 : i64, scratch_operands = 0 : i64, tpu.core_type = #tpu.core_type<tc>, window_params = [{transform_indices = @transform_0, window_bounds = array<i64: 1, 8, 32>}, {pipeline_mode = #tpu.pipeline_mode<synchronous>, transform_indices = @transform_1, window_bounds = array<i64: 16, 8>}, {pipeline_mode = #tpu.pipeline_mode<synchronous>, transform_indices = @transform_2, window_bounds = array<i64: 8, 32, 32>}, {pipeline_mode = #tpu.pipeline_mode<synchronous>, transform_indices = @transform_3, window_bounds = array<i64: 1, 32>}, {pipeline_mode = #tpu.pipeline_mode<synchronous>, transform_indices = @transform_4, window_bounds = array<i64: 1, 32>}, {pipeline_mode = #tpu.pipeline_mode<synchronous>, transform_indices = @transform_5, window_bounds = array<i64: 1, 32>}, {transform_indices = @transform_6, window_bounds = array<i64: 1, 8, 32>}]} {
    %c0 = arith.constant 0 : index
    %c0_0 = arith.constant 0 : index
    %0 = vector.load %arg2[%c0, %c0_0] : memref<16x8xbf16, #tpu.memory_space<vmem>>, vector<16x8xbf16>
    %c0_1 = arith.constant 0 : index
    %c0_2 = arith.constant 0 : index
    %c0_3 = arith.constant 0 : index
    %1 = vector.load %arg3[%c0_1, %c0_2, %c0_3] : memref<8x32x32xbf16, #tpu.memory_space<vmem>>, vector<1x32x32xbf16>
    %2 = vector.shape_cast %1 : vector<1x32x32xbf16> to vector<32x32xbf16>
    %c1 = arith.constant 1 : index
    %c0_4 = arith.constant 0 : index
    %c0_5 = arith.constant 0 : index
    %3 = vector.load %arg3[%c1, %c0_4, %c0_5] : memref<8x32x32xbf16, #tpu.memory_space<vmem>>, vector<1x32x32xbf16>
    %4 = vector.shape_cast %3 : vector<1x32x32xbf16> to vector<32x32xbf16>
    %c2 = arith.constant 2 : index
    %c0_6 = arith.constant 0 : index
    %c0_7 = arith.constant 0 : index
    %5 = vector.load %arg3[%c2, %c0_6, %c0_7] : memref<8x32x32xbf16, #tpu.memory_space<vmem>>, vector<1x32x32xbf16>
    %6 = vector.shape_cast %5 : vector<1x32x32xbf16> to vector<32x32xbf16>
    %c3 = arith.constant 3 : index
    %c0_8 = arith.constant 0 : index
    %c0_9 = arith.constant 0 : index
    %7 = vector.load %arg3[%c3, %c0_8, %c0_9] : memref<8x32x32xbf16, #tpu.memory_space<vmem>>, vector<1x32x32xbf16>
    %8 = vector.shape_cast %7 : vector<1x32x32xbf16> to vector<32x32xbf16>
    %c4 = arith.constant 4 : index
    %c0_10 = arith.constant 0 : index
    %c0_11 = arith.constant 0 : index
    %9 = vector.load %arg3[%c4, %c0_10, %c0_11] : memref<8x32x32xbf16, #tpu.memory_space<vmem>>, vector<1x32x32xbf16>
    %10 = vector.shape_cast %9 : vector<1x32x32xbf16> to vector<32x32xbf16>
    %c5 = arith.constant 5 : index
    %c0_12 = arith.constant 0 : index
    %c0_13 = arith.constant 0 : index
    %11 = vector.load %arg3[%c5, %c0_12, %c0_13] : memref<8x32x32xbf16, #tpu.memory_space<vmem>>, vector<1x32x32xbf16>
    %12 = vector.shape_cast %11 : vector<1x32x32xbf16> to vector<32x32xbf16>
    %c6 = arith.constant 6 : index
    %c0_14 = arith.constant 0 : index
    %c0_15 = arith.constant 0 : index
    %13 = vector.load %arg3[%c6, %c0_14, %c0_15] : memref<8x32x32xbf16, #tpu.memory_space<vmem>>, vector<1x32x32xbf16>
    %14 = vector.shape_cast %13 : vector<1x32x32xbf16> to vector<32x32xbf16>
    %c7 = arith.constant 7 : index
    %c0_16 = arith.constant 0 : index
    %c0_17 = arith.constant 0 : index
    %15 = vector.load %arg3[%c7, %c0_16, %c0_17] : memref<8x32x32xbf16, #tpu.memory_space<vmem>>, vector<1x32x32xbf16>
    %16 = vector.shape_cast %15 : vector<1x32x32xbf16> to vector<32x32xbf16>
    %c0_18 = arith.constant 0 : index
    %c0_19 = arith.constant 0 : index
    %17 = vector.load %arg4[%c0_18, %c0_19] : memref<1x32xf32, #tpu.memory_space<vmem>>, vector<1x32xf32>
    %c0_20 = arith.constant 0 : index
    %c0_21 = arith.constant 0 : index
    %18 = vector.load %arg5[%c0_20, %c0_21] : memref<1x32xf32, #tpu.memory_space<vmem>>, vector<1x32xf32>
    %c0_22 = arith.constant 0 : index
    %c0_23 = arith.constant 0 : index
    %19 = vector.load %arg6[%c0_22, %c0_23] : memref<1x32xf32, #tpu.memory_space<vmem>>, vector<1x32xf32>
    %c0_24 = arith.constant 0 : index
    %c0_25 = arith.constant 0 : index
    %c0_26 = arith.constant 0 : index
    %20 = vector.load %arg1[%c0_24, %c0_25, %c0_26] : memref<1x8x32xf32, #tpu.memory_space<vmem>>, vector<1x8x32xf32>
    %21 = vector.shape_cast %20 : vector<1x8x32xf32> to vector<8x32xf32>
    %22 = arith.truncf %21 : vector<8x32xf32> to vector<8x32xbf16>
    %cst = arith.constant dense<0.000000e+00> : vector<16x32xf32>
    %23 = tpu.matmul %0, %22, %cst {dimension_numbers = #tpu.dot_dimension_numbers<[1], [0], [0], [1], [0, 0, 1, 1], [], []>} : vector<16x8xbf16>, vector<8x32xbf16>, vector<16x32xf32> -> vector<16x32xf32>
    %24 = vector.extract_strided_slice %23 {offsets = [0, 0], sizes = [8, 32], strides = [1, 1]} : vector<16x32xf32> to vector<8x32xf32>
    %25 = arith.truncf %24 : vector<8x32xf32> to vector<8x32xbf16>
    %26 = vector.extract_strided_slice %23 {offsets = [8, 0], sizes = [8, 32], strides = [1, 1]} : vector<16x32xf32> to vector<8x32xf32>
    %27 = arith.truncf %26 : vector<8x32xf32> to vector<8x32xbf16>
    %cst_27 = arith.constant dense<0.000000e+00> : vector<8x32xf32>
    %28 = tpu.matmul %22, %6, %cst_27 {dimension_numbers = #tpu.dot_dimension_numbers<[1], [0], [0], [1], [0, 0, 1, 1], [], []>} : vector<8x32xbf16>, vector<32x32xbf16>, vector<8x32xf32> -> vector<8x32xf32>
    %cst_28 = arith.constant dense<0.000000e+00> : vector<8x32xf32>
    %29 = tpu.matmul %25, %2, %cst_28 {dimension_numbers = #tpu.dot_dimension_numbers<[1], [0], [0], [1], [0, 0, 1, 1], [], []>} : vector<8x32xbf16>, vector<32x32xbf16>, vector<8x32xf32> -> vector<8x32xf32>
    %cst_29 = arith.constant dense<0.000000e+00> : vector<8x32xf32>
    %30 = tpu.matmul %27, %4, %cst_29 {dimension_numbers = #tpu.dot_dimension_numbers<[1], [0], [0], [1], [0, 0, 1, 1], [], []>} : vector<8x32xbf16>, vector<32x32xbf16>, vector<8x32xf32> -> vector<8x32xf32>
    %31 = arith.addf %29, %30 : vector<8x32xf32>
    %32 = arith.addf %31, %28 : vector<8x32xf32>
    %33 = vector.broadcast %17 : vector<1x32xf32> to vector<8x32xf32>
    %34 = arith.addf %32, %33 : vector<8x32xf32>
    %cst_30 = arith.constant dense<0.000000e+00> : vector<8x32xf32>
    %35 = tpu.matmul %25, %8, %cst_30 {dimension_numbers = #tpu.dot_dimension_numbers<[1], [0], [0], [1], [0, 0, 1, 1], [], []>} : vector<8x32xbf16>, vector<32x32xbf16>, vector<8x32xf32> -> vector<8x32xf32>
    %cst_31 = arith.constant dense<0.000000e+00> : vector<8x32xf32>
    %36 = tpu.matmul %27, %10, %cst_31 {dimension_numbers = #tpu.dot_dimension_numbers<[1], [0], [0], [1], [0, 0, 1, 1], [], []>} : vector<8x32xbf16>, vector<32x32xbf16>, vector<8x32xf32> -> vector<8x32xf32>
    %37 = arith.addf %35, %36 : vector<8x32xf32>
    %38 = arith.addf %37, %28 : vector<8x32xf32>
    %39 = vector.broadcast %18 : vector<1x32xf32> to vector<8x32xf32>
    %40 = arith.addf %38, %39 : vector<8x32xf32>
    %41 = arith.negf %34 : vector<8x32xf32>
    %42 = math.exp %41 : vector<8x32xf32>
    %cst_32 = arith.constant 1.000000e+00 : f32
    %43 = vector.broadcast %cst_32 : f32 to vector<8x32xf32>
    %44 = arith.addf %43, %42 : vector<8x32xf32>
    %45 = arith.divf %43, %44 : vector<8x32xf32>
    %46 = arith.negf %40 : vector<8x32xf32>
    %47 = math.exp %46 : vector<8x32xf32>
    %cst_33 = arith.constant 1.000000e+00 : f32
    %48 = vector.broadcast %cst_33 : f32 to vector<8x32xf32>
    %49 = arith.addf %48, %47 : vector<8x32xf32>
    %50 = arith.divf %48, %49 : vector<8x32xf32>
    %cst_34 = arith.constant dense<0.000000e+00> : vector<8x32xf32>
    %51 = tpu.matmul %25, %12, %cst_34 {dimension_numbers = #tpu.dot_dimension_numbers<[1], [0], [0], [1], [0, 0, 1, 1], [], []>} : vector<8x32xbf16>, vector<32x32xbf16>, vector<8x32xf32> -> vector<8x32xf32>
    %cst_35 = arith.constant dense<0.000000e+00> : vector<8x32xf32>
    %52 = tpu.matmul %27, %14, %cst_35 {dimension_numbers = #tpu.dot_dimension_numbers<[1], [0], [0], [1], [0, 0, 1, 1], [], []>} : vector<8x32xbf16>, vector<32x32xbf16>, vector<8x32xf32> -> vector<8x32xf32>
    %53 = arith.addf %51, %52 : vector<8x32xf32>
    %54 = arith.mulf %50, %21 : vector<8x32xf32>
    %55 = arith.truncf %54 : vector<8x32xf32> to vector<8x32xbf16>
    %cst_36 = arith.constant dense<0.000000e+00> : vector<8x32xf32>
    %56 = tpu.matmul %55, %16, %cst_36 {dimension_numbers = #tpu.dot_dimension_numbers<[1], [0], [0], [1], [0, 0, 1, 1], [], []>} : vector<8x32xbf16>, vector<32x32xbf16>, vector<8x32xf32> -> vector<8x32xf32>
    %57 = arith.addf %53, %56 : vector<8x32xf32>
    %58 = vector.broadcast %19 : vector<1x32xf32> to vector<8x32xf32>
    %59 = arith.addf %57, %58 : vector<8x32xf32>
    %60 = math.tanh %59 : vector<8x32xf32>
    %cst_37 = arith.constant 1.000000e+00 : f32
    %61 = vector.broadcast %cst_37 : f32 to vector<8x32xf32>
    %62 = arith.subf %61, %45 : vector<8x32xf32>
    %63 = arith.mulf %62, %21 : vector<8x32xf32>
    %64 = arith.mulf %45, %60 : vector<8x32xf32>
    %65 = arith.addf %63, %64 : vector<8x32xf32>
    %66 = arith.truncf %65 : vector<8x32xf32> to vector<8x32xbf16>
    %cst_38 = arith.constant dense<0.000000e+00> : vector<16x32xf32>
    %67 = tpu.matmul %0, %66, %cst_38 {dimension_numbers = #tpu.dot_dimension_numbers<[1], [0], [0], [1], [0, 0, 1, 1], [], []>} : vector<16x8xbf16>, vector<8x32xbf16>, vector<16x32xf32> -> vector<16x32xf32>
    %68 = vector.extract_strided_slice %67 {offsets = [0, 0], sizes = [8, 32], strides = [1, 1]} : vector<16x32xf32> to vector<8x32xf32>
    %69 = arith.truncf %68 : vector<8x32xf32> to vector<8x32xbf16>
    %70 = vector.extract_strided_slice %67 {offsets = [8, 0], sizes = [8, 32], strides = [1, 1]} : vector<16x32xf32> to vector<8x32xf32>
    %71 = arith.truncf %70 : vector<8x32xf32> to vector<8x32xbf16>
    %cst_39 = arith.constant dense<0.000000e+00> : vector<8x32xf32>
    %72 = tpu.matmul %66, %6, %cst_39 {dimension_numbers = #tpu.dot_dimension_numbers<[1], [0], [0], [1], [0, 0, 1, 1], [], []>} : vector<8x32xbf16>, vector<32x32xbf16>, vector<8x32xf32> -> vector<8x32xf32>
    %cst_40 = arith.constant dense<0.000000e+00> : vector<8x32xf32>
    %73 = tpu.matmul %69, %2, %cst_40 {dimension_numbers = #tpu.dot_dimension_numbers<[1], [0], [0], [1], [0, 0, 1, 1], [], []>} : vector<8x32xbf16>, vector<32x32xbf16>, vector<8x32xf32> -> vector<8x32xf32>
    %cst_41 = arith.constant dense<0.000000e+00> : vector<8x32xf32>
    %74 = tpu.matmul %71, %4, %cst_41 {dimension_numbers = #tpu.dot_dimension_numbers<[1], [0], [0], [1], [0, 0, 1, 1], [], []>} : vector<8x32xbf16>, vector<32x32xbf16>, vector<8x32xf32> -> vector<8x32xf32>
    %75 = arith.addf %73, %74 : vector<8x32xf32>
    %76 = arith.addf %75, %72 : vector<8x32xf32>
    %77 = vector.broadcast %17 : vector<1x32xf32> to vector<8x32xf32>
    %78 = arith.addf %76, %77 : vector<8x32xf32>
    %cst_42 = arith.constant dense<0.000000e+00> : vector<8x32xf32>
    %79 = tpu.matmul %69, %8, %cst_42 {dimension_numbers = #tpu.dot_dimension_numbers<[1], [0], [0], [1], [0, 0, 1, 1], [], []>} : vector<8x32xbf16>, vector<32x32xbf16>, vector<8x32xf32> -> vector<8x32xf32>
    %cst_43 = arith.constant dense<0.000000e+00> : vector<8x32xf32>
    %80 = tpu.matmul %71, %10, %cst_43 {dimension_numbers = #tpu.dot_dimension_numbers<[1], [0], [0], [1], [0, 0, 1, 1], [], []>} : vector<8x32xbf16>, vector<32x32xbf16>, vector<8x32xf32> -> vector<8x32xf32>
    %81 = arith.addf %79, %80 : vector<8x32xf32>
    %82 = arith.addf %81, %72 : vector<8x32xf32>
    %83 = vector.broadcast %18 : vector<1x32xf32> to vector<8x32xf32>
    %84 = arith.addf %82, %83 : vector<8x32xf32>
    %85 = arith.negf %78 : vector<8x32xf32>
    %86 = math.exp %85 : vector<8x32xf32>
    %cst_44 = arith.constant 1.000000e+00 : f32
    %87 = vector.broadcast %cst_44 : f32 to vector<8x32xf32>
    %88 = arith.addf %87, %86 : vector<8x32xf32>
    %89 = arith.divf %87, %88 : vector<8x32xf32>
    %90 = arith.negf %84 : vector<8x32xf32>
    %91 = math.exp %90 : vector<8x32xf32>
    %cst_45 = arith.constant 1.000000e+00 : f32
    %92 = vector.broadcast %cst_45 : f32 to vector<8x32xf32>
    %93 = arith.addf %92, %91 : vector<8x32xf32>
    %94 = arith.divf %92, %93 : vector<8x32xf32>
    %cst_46 = arith.constant dense<0.000000e+00> : vector<8x32xf32>
    %95 = tpu.matmul %69, %12, %cst_46 {dimension_numbers = #tpu.dot_dimension_numbers<[1], [0], [0], [1], [0, 0, 1, 1], [], []>} : vector<8x32xbf16>, vector<32x32xbf16>, vector<8x32xf32> -> vector<8x32xf32>
    %cst_47 = arith.constant dense<0.000000e+00> : vector<8x32xf32>
    %96 = tpu.matmul %71, %14, %cst_47 {dimension_numbers = #tpu.dot_dimension_numbers<[1], [0], [0], [1], [0, 0, 1, 1], [], []>} : vector<8x32xbf16>, vector<32x32xbf16>, vector<8x32xf32> -> vector<8x32xf32>
    %97 = arith.addf %95, %96 : vector<8x32xf32>
    %98 = arith.mulf %94, %65 : vector<8x32xf32>
    %99 = arith.truncf %98 : vector<8x32xf32> to vector<8x32xbf16>
    %cst_48 = arith.constant dense<0.000000e+00> : vector<8x32xf32>
    %100 = tpu.matmul %99, %16, %cst_48 {dimension_numbers = #tpu.dot_dimension_numbers<[1], [0], [0], [1], [0, 0, 1, 1], [], []>} : vector<8x32xbf16>, vector<32x32xbf16>, vector<8x32xf32> -> vector<8x32xf32>
    %101 = arith.addf %97, %100 : vector<8x32xf32>
    %102 = vector.broadcast %19 : vector<1x32xf32> to vector<8x32xf32>
    %103 = arith.addf %101, %102 : vector<8x32xf32>
    %104 = math.tanh %103 : vector<8x32xf32>
    %cst_49 = arith.constant 1.000000e+00 : f32
    %105 = vector.broadcast %cst_49 : f32 to vector<8x32xf32>
    %106 = arith.subf %105, %89 : vector<8x32xf32>
    %107 = arith.mulf %106, %65 : vector<8x32xf32>
    %108 = arith.mulf %89, %104 : vector<8x32xf32>
    %109 = arith.addf %107, %108 : vector<8x32xf32>
    %110 = arith.truncf %109 : vector<8x32xf32> to vector<8x32xbf16>
    %cst_50 = arith.constant dense<0.000000e+00> : vector<16x32xf32>
    %111 = tpu.matmul %0, %110, %cst_50 {dimension_numbers = #tpu.dot_dimension_numbers<[1], [0], [0], [1], [0, 0, 1, 1], [], []>} : vector<16x8xbf16>, vector<8x32xbf16>, vector<16x32xf32> -> vector<16x32xf32>
    %112 = vector.extract_strided_slice %111 {offsets = [0, 0], sizes = [8, 32], strides = [1, 1]} : vector<16x32xf32> to vector<8x32xf32>
    %113 = arith.truncf %112 : vector<8x32xf32> to vector<8x32xbf16>
    %114 = vector.extract_strided_slice %111 {offsets = [8, 0], sizes = [8, 32], strides = [1, 1]} : vector<16x32xf32> to vector<8x32xf32>
    %115 = arith.truncf %114 : vector<8x32xf32> to vector<8x32xbf16>
    %cst_51 = arith.constant dense<0.000000e+00> : vector<8x32xf32>
    %116 = tpu.matmul %110, %6, %cst_51 {dimension_numbers = #tpu.dot_dimension_numbers<[1], [0], [0], [1], [0, 0, 1, 1], [], []>} : vector<8x32xbf16>, vector<32x32xbf16>, vector<8x32xf32> -> vector<8x32xf32>
    %cst_52 = arith.constant dense<0.000000e+00> : vector<8x32xf32>
    %117 = tpu.matmul %113, %2, %cst_52 {dimension_numbers = #tpu.dot_dimension_numbers<[1], [0], [0], [1], [0, 0, 1, 1], [], []>} : vector<8x32xbf16>, vector<32x32xbf16>, vector<8x32xf32> -> vector<8x32xf32>
    %cst_53 = arith.constant dense<0.000000e+00> : vector<8x32xf32>
    %118 = tpu.matmul %115, %4, %cst_53 {dimension_numbers = #tpu.dot_dimension_numbers<[1], [0], [0], [1], [0, 0, 1, 1], [], []>} : vector<8x32xbf16>, vector<32x32xbf16>, vector<8x32xf32> -> vector<8x32xf32>
    %119 = arith.addf %117, %118 : vector<8x32xf32>
    %120 = arith.addf %119, %116 : vector<8x32xf32>
    %121 = vector.broadcast %17 : vector<1x32xf32> to vector<8x32xf32>
    %122 = arith.addf %120, %121 : vector<8x32xf32>
    %cst_54 = arith.constant dense<0.000000e+00> : vector<8x32xf32>
    %123 = tpu.matmul %113, %8, %cst_54 {dimension_numbers = #tpu.dot_dimension_numbers<[1], [0], [0], [1], [0, 0, 1, 1], [], []>} : vector<8x32xbf16>, vector<32x32xbf16>, vector<8x32xf32> -> vector<8x32xf32>
    %cst_55 = arith.constant dense<0.000000e+00> : vector<8x32xf32>
    %124 = tpu.matmul %115, %10, %cst_55 {dimension_numbers = #tpu.dot_dimension_numbers<[1], [0], [0], [1], [0, 0, 1, 1], [], []>} : vector<8x32xbf16>, vector<32x32xbf16>, vector<8x32xf32> -> vector<8x32xf32>
    %125 = arith.addf %123, %124 : vector<8x32xf32>
    %126 = arith.addf %125, %116 : vector<8x32xf32>
    %127 = vector.broadcast %18 : vector<1x32xf32> to vector<8x32xf32>
    %128 = arith.addf %126, %127 : vector<8x32xf32>
    %129 = arith.negf %122 : vector<8x32xf32>
    %130 = math.exp %129 : vector<8x32xf32>
    %cst_56 = arith.constant 1.000000e+00 : f32
    %131 = vector.broadcast %cst_56 : f32 to vector<8x32xf32>
    %132 = arith.addf %131, %130 : vector<8x32xf32>
    %133 = arith.divf %131, %132 : vector<8x32xf32>
    %134 = arith.negf %128 : vector<8x32xf32>
    %135 = math.exp %134 : vector<8x32xf32>
    %cst_57 = arith.constant 1.000000e+00 : f32
    %136 = vector.broadcast %cst_57 : f32 to vector<8x32xf32>
    %137 = arith.addf %136, %135 : vector<8x32xf32>
    %138 = arith.divf %136, %137 : vector<8x32xf32>
    %cst_58 = arith.constant dense<0.000000e+00> : vector<8x32xf32>
    %139 = tpu.matmul %113, %12, %cst_58 {dimension_numbers = #tpu.dot_dimension_numbers<[1], [0], [0], [1], [0, 0, 1, 1], [], []>} : vector<8x32xbf16>, vector<32x32xbf16>, vector<8x32xf32> -> vector<8x32xf32>
    %cst_59 = arith.constant dense<0.000000e+00> : vector<8x32xf32>
    %140 = tpu.matmul %115, %14, %cst_59 {dimension_numbers = #tpu.dot_dimension_numbers<[1], [0], [0], [1], [0, 0, 1, 1], [], []>} : vector<8x32xbf16>, vector<32x32xbf16>, vector<8x32xf32> -> vector<8x32xf32>
    %141 = arith.addf %139, %140 : vector<8x32xf32>
    %142 = arith.mulf %138, %109 : vector<8x32xf32>
    %143 = arith.truncf %142 : vector<8x32xf32> to vector<8x32xbf16>
    %cst_60 = arith.constant dense<0.000000e+00> : vector<8x32xf32>
    %144 = tpu.matmul %143, %16, %cst_60 {dimension_numbers = #tpu.dot_dimension_numbers<[1], [0], [0], [1], [0, 0, 1, 1], [], []>} : vector<8x32xbf16>, vector<32x32xbf16>, vector<8x32xf32> -> vector<8x32xf32>
    %145 = arith.addf %141, %144 : vector<8x32xf32>
    %146 = vector.broadcast %19 : vector<1x32xf32> to vector<8x32xf32>
    %147 = arith.addf %145, %146 : vector<8x32xf32>
    %148 = math.tanh %147 : vector<8x32xf32>
    %cst_61 = arith.constant 1.000000e+00 : f32
    %149 = vector.broadcast %cst_61 : f32 to vector<8x32xf32>
    %150 = arith.subf %149, %133 : vector<8x32xf32>
    %151 = arith.mulf %150, %109 : vector<8x32xf32>
    %152 = arith.mulf %133, %148 : vector<8x32xf32>
    %153 = arith.addf %151, %152 : vector<8x32xf32>
    %c0_62 = arith.constant 0 : index
    %c0_63 = arith.constant 0 : index
    %c0_64 = arith.constant 0 : index
    %154 = vector.load %arg7[%c0_62, %c0_63, %c0_64] : memref<1x8x32xf32, #tpu.memory_space<vmem>>, vector<1x8x32xf32>
    %155 = vector.shape_cast %154 : vector<1x8x32xf32> to vector<8x32xf32>
    %156 = vector.shape_cast %153 : vector<8x32xf32> to vector<1x8x32xf32>
    tpu.vector_store %arg7[%c0_62, %c0_63, %c0_64], %156 {strides = array<i32>} : memref<1x8x32xf32, #tpu.memory_space<vmem>>, vector<1x8x32xf32>,
    return
  }
  func.func @transform_0(%arg0: i32) -> (i32, i32, i32) {
    %c0_i32 = arith.constant 0 : i32
    %c0_i32_0 = arith.constant 0 : i32
    %c0_i32_1 = arith.constant 0 : i32
    return %arg0, %c0_i32, %c0_i32_0 : i32, i32, i32
  }
  func.func @transform_1(%arg0: i32) -> (i32, i32) {
    %c0_i32 = arith.constant 0 : i32
    %c0_i32_0 = arith.constant 0 : i32
    %c0_i32_1 = arith.constant 0 : i32
    return %c0_i32, %c0_i32_0 : i32, i32
  }
  func.func @transform_2(%arg0: i32) -> (i32, i32, i32) {
    %c0_i32 = arith.constant 0 : i32
    %c0_i32_0 = arith.constant 0 : i32
    %c0_i32_1 = arith.constant 0 : i32
    %c0_i32_2 = arith.constant 0 : i32
    return %c0_i32, %c0_i32_0, %c0_i32_1 : i32, i32, i32
  }
  func.func @transform_3(%arg0: i32) -> (i32, i32) {
    %c0_i32 = arith.constant 0 : i32
    %c0_i32_0 = arith.constant 0 : i32
    %c0_i32_1 = arith.constant 0 : i32
    return %c0_i32, %c0_i32_0 : i32, i32
  }
  func.func @transform_4(%arg0: i32) -> (i32, i32) {
    %c0_i32 = arith.constant 0 : i32
    %c0_i32_0 = arith.constant 0 : i32
    %c0_i32_1 = arith.constant 0 : i32
    return %c0_i32, %c0_i32_0 : i32, i32
  }
  func.func @transform_5(%arg0: i32) -> (i32, i32) {
    %c0_i32 = arith.constant 0 : i32
    %c0_i32_0 = arith.constant 0 : i32
    %c0_i32_1 = arith.constant 0 : i32
    return %c0_i32, %c0_i32_0 : i32, i32
  }
  func.func @transform_6(%arg0: i32) -> (i32, i32, i32) {
    %c0_i32 = arith.constant 0 : i32
    %c0_i32_0 = arith.constant 0 : i32
    %c0_i32_1 = arith.constant 0 : i32
    return %arg0, %c0_i32, %c0_i32_0 : i32, i32, i32
  }
}

</mosaic_0001>

<llo_original>
// kernel: tpu_custom_call.1
$region0: #{tpu_custom_call.1}
  #allocation0 [shape = 'u32[]', space=smem, size = 0x4, offset = 0x4, fixed_abs, tag = 'smem constant byte address 0x4 - core index']
  #allocation1 [shape = 'u32[72,128]{1,0:T(1,128)}', space=vmem, size = 0x9000, scoped, tag = 'internal scratch']
  %s0 = inlined_call_operand.hbm [shape: f32[2,8,32], index: 0, kind: input, shape index: {}]
  %s1 = inlined_call_operand.vmem [shape: bf16[16,8], index: 1, kind: input, shape index: {}]
  %s2 = inlined_call_operand.hbm [shape: bf16[8,32,32], index: 2, kind: input, shape index: {}]
  %s3 = inlined_call_operand.vmem [shape: f32[1,32], index: 3, kind: input, shape index: {}]
  %s4 = inlined_call_operand.vmem [shape: f32[1,32], index: 4, kind: input, shape index: {}]
  %s5 = inlined_call_operand.vmem [shape: f32[1,32], index: 5, kind: input, shape index: {}]
  %s6 = inlined_call_operand.hbm [shape: f32[2,8,32], index: 6, kind: output, shape index: {}]
  %s7 = sld [smem:[#allocation0]]
  $region65: #{tpu_custom_call.1} parent=0
    _
  %s9 = ssub.s32 1, %s7
  %s10 = scalar_select 0, %s9, %s7
  $region1: #{tpu_custom_call.1} parent=0
    #allocation2 [shape = 'u8[8192]{0}', space=vmem, size = 0x2000, scoped, tag = 'input window, operand 0']
    #allocation3 [shape = 's32[2]{0}', space=sflag, size = 0x8, scoped, tag = 'scoped memory for tpu_custom_call.1']
    #allocation4 [shape = 's32[2]{0}', space=sflag, size = 0x8, scoped, tag = 'scoped memory for tpu_custom_call.1']
    #allocation5 [shape = 'u8[65536]{0}', space=vmem, size = 0x10000, scoped, tag = 'input window, operand 2, single buffered']
    #allocation6 [shape = 's32[1]{0}', space=sflag, size = 0x4, scoped, tag = 'scoped memory for tpu_custom_call.1']
    #allocation7 [shape = 'u8[8192]{0}', space=vmem, size = 0x2000, scoped, tag = 'output window, operand 0']
    %11 = vsyncpa [#allocation3], 0
    %s12 = scalar_lea.sflag [#allocation3], 1
    %13 = vsyncpa %s12, 0
    %14 = vsyncpa [#allocation6], 0
    %15 = vsyncpa [#allocation4], 0
    %s16 = scalar_lea.sflag [#allocation4], 1
    %17 = vsyncpa %s16, 0
    loop: start=0, step=1, limit=4
    $region2: #{tpu_custom_call.1} parent=1 // loop_pre_header
      _
    $region3: #{tpu_custom_call.1} parent=1 // loop_header
      %s19 = sphi 0, %s23
      %p20 = scmp.ge.s32.totalorder %s19, 4
      %s29 = sphi 0, %s31
      %s32 = sphi 0, %s29
      %s33 = sphi 0, %s32
      %s49 = sphi 0, %s33
      %s53 = sphi 0, %s53
      %s55 = sphi 0, %s53
      %s56 = sphi 0, %s55
      %s70 = sphi 0, %s56
      %s74 = sphi 0, %s74
      %s76 = sphi 0, %s74
      %s77 = sphi 0, %s76
      %s91 = sphi 0, %s77
      %s95 = sphi 0, %s95
      %s97 = sphi 0, %s95
      %s98 = sphi 0, %s97
      %s112 = sphi 0, %s98
      %s116 = sphi 0, %s116
      %s118 = sphi 0, %s116
      %s119 = sphi 0, %s118
      %s133 = sphi 0, %s119
      %s137 = sphi 0, %s137
      %s139 = sphi 0, %s137
      %s140 = sphi 0, %s139
      %s154 = sphi 0, %s140
      %s160 = sphi 0, %s162
      %s163 = sphi 0, %s160
      %s164 = sphi 0, %s163
      %s180 = sphi 0, %s164
    $region4: #{tpu_custom_call.1} parent=1 // loop_header_branch
      %22 = sbr.rel (%p20) target = $region8
    $region5: #{tpu_custom_call.1} parent=1 // loop_body
      %s24 = ssub.s32 %s19, 1
      %s25 = ssub.s32 %s19, 2
      %s26 = sadd.s32 %s19, 1
      %s27 = ssub.s32 %s19, %s26
      %p28 = scmp.eq.s32.totalorder %s27, 0
      %s30 = sadd.s32 %s29, 1
      %s31 = scalar_select %p28, %s29, %s30
      %p34 = pneg %p28
      %p35 = scmp.eq.s32.totalorder %s19, 1
      %p36 = por %p34, %p35
      %p37 = scmp.ne.s32.totalorder %s29, %s32
      %p38 = scmp.eq.s32.totalorder %s19, 0
      %p39 = por %p37, %p38
      %p40 = scmp.ne.s32.totalorder %s29, %s32
      %p41 = scmp.eq.s32.totalorder %s24, 1
      %p42 = por %p40, %p41
      %p43 = scmp.ne.s32.totalorder %s32, %s33
      %p44 = scmp.eq.s32.totalorder %s24, 0
      %p45 = por %p43, %p44
      %p46 = scmp.ne.s32.totalorder %s32, %s33
      %p47 = scmp.eq.s32.totalorder %s25, 1
      %p48 = por %p46, %p47
      %p50 = scmp.ne.s32.totalorder %s33, %s49
      %p51 = scmp.eq.s32.totalorder %s25, 0
      %p52 = por %p50, %p51
      %s54 = sadd.s32 %s53, 1
      %p57 = scmp.eq.s32.totalorder %s19, 1
      %p58 = scmp.ne.s32.totalorder %s53, %s55
      %p59 = scmp.eq.s32.totalorder %s19, 0
      %p60 = por %p58, %p59
      %p61 = scmp.ne.s32.totalorder %s53, %s55
      %p62 = scmp.eq.s32.totalorder %s24, 1
      %p63 = por %p61, %p62
      %p64 = scmp.ne.s32.totalorder %s55, %s56
      %p65 = scmp.eq.s32.totalorder %s24, 0
      %p66 = por %p64, %p65
      %p67 = scmp.ne.s32.totalorder %s55, %s56
      %p68 = scmp.eq.s32.totalorder %s25, 1
      %p69 = por %p67, %p68
      %p71 = scmp.ne.s32.totalorder %s56, %s70
      %p72 = scmp.eq.s32.totalorder %s25, 0
      %p73 = por %p71, %p72
      %s75 = sadd.s32 %s74, 1
      %p78 = scmp.eq.s32.totalorder %s19, 1
      %p79 = scmp.ne.s32.totalorder %s74, %s76
      %p80 = scmp.eq.s32.totalorder %s19, 0
      %p81 = por %p79, %p80
      %p82 = scmp.ne.s32.totalorder %s74, %s76
      %p83 = scmp.eq.s32.totalorder %s24, 1
      %p84 = por %p82, %p83
      %p85 = scmp.ne.s32.totalorder %s76, %s77
      %p86 = scmp.eq.s32.totalorder %s24, 0
      %p87 = por %p85, %p86
      %p88 = scmp.ne.s32.totalorder %s76, %s77
      %p89 = scmp.eq.s32.totalorder %s25, 1
      %p90 = por %p88, %p89
      %p92 = scmp.ne.s32.totalorder %s77, %s91
      %p93 = scmp.eq.s32.totalorder %s25, 0
      %p94 = por %p92, %p93
      %s96 = sadd.s32 %s95, 1
      %p99 = scmp.eq.s32.totalorder %s19, 1
      %p100 = scmp.ne.s32.totalorder %s95, %s97
      %p101 = scmp.eq.s32.totalorder %s19, 0
      %p102 = por %p100, %p101
      %p103 = scmp.ne.s32.totalorder %s95, %s97
      %p104 = scmp.eq.s32.totalorder %s24, 1
      %p105 = por %p103, %p104
      %p106 = scmp.ne.s32.totalorder %s97, %s98
      %p107 = scmp.eq.s32.totalorder %s24, 0
      %p108 = por %p106, %p107
      %p109 = scmp.ne.s32.totalorder %s97, %s98
      %p110 = scmp.eq.s32.totalorder %s25, 1
      %p111 = por %p109, %p110
      %p113 = scmp.ne.s32.totalorder %s98, %s112
      %p114 = scmp.eq.s32.totalorder %s25, 0
      %p115 = por %p113, %p114
      %s117 = sadd.s32 %s116, 1
      %p120 = scmp.eq.s32.totalorder %s19, 1
      %p121 = scmp.ne.s32.totalorder %s116, %s118
      %p122 = scmp.eq.s32.totalorder %s19, 0
      %p123 = por %p121, %p122
      %p124 = scmp.ne.s32.totalorder %s116, %s118
      %p125 = scmp.eq.s32.totalorder %s24, 1
      %p126 = por %p124, %p125
      %p127 = scmp.ne.s32.totalorder %s118, %s119
      %p128 = scmp.eq.s32.totalorder %s24, 0
      %p129 = por %p127, %p128
      %p130 = scmp.ne.s32.totalorder %s118, %s119
      %p131 = scmp.eq.s32.totalorder %s25, 1
      %p132 = por %p130, %p131
      %p134 = scmp.ne.s32.totalorder %s119, %s133
      %p135 = scmp.eq.s32.totalorder %s25, 0
      %p136 = por %p134, %p135
      %s138 = sadd.s32 %s137, 1
      %p141 = scmp.eq.s32.totalorder %s19, 1
      %p142 = scmp.ne.s32.totalorder %s137, %s139
      %p143 = scmp.eq.s32.totalorder %s19, 0
      %p144 = por %p142, %p143
      %p145 = scmp.ne.s32.totalorder %s137, %s139
      %p146 = scmp.eq.s32.totalorder %s24, 1
      %p147 = por %p145, %p146
      %p148 = scmp.ne.s32.totalorder %s139, %s140
      %p149 = scmp.eq.s32.totalorder %s24, 0
      %p150 = por %p148, %p149
      %p151 = scmp.ne.s32.totalorder %s139, %s140
      %p152 = scmp.eq.s32.totalorder %s25, 1
      %p153 = por %p151, %p152
      %p155 = scmp.ne.s32.totalorder %s140, %s154
      %p156 = scmp.eq.s32.totalorder %s25, 0
      %p157 = por %p155, %p156
      %s158 = ssub.s32 %s19, %s26
      %p159 = scmp.eq.s32.totalorder %s158, 0
      %s161 = sadd.s32 %s160, 1
      %s162 = scalar_select %p159, %s160, %s161
      %p165 = pneg %p159
      %p166 = scmp.eq.s32.totalorder %s19, 1
      %p167 = por %p165, %p166
      %p168 = scmp.ne.s32.totalorder %s160, %s163
      %p169 = scmp.eq.s32.totalorder %s19, 0
      %p170 = por %p168, %p169
      %p171 = scmp.ne.s32.totalorder %s160, %s163
      %p172 = scmp.eq.s32.totalorder %s24, 1
      %p173 = por %p171, %p172
      %p174 = scmp.ne.s32.totalorder %s163, %s164
      %p175 = scmp.eq.s32.totalorder %s24, 0
      %p176 = por %p174, %p175
      %p177 = scmp.ne.s32.totalorder %s163, %s164
      %p178 = scmp.eq.s32.totalorder %s25, 1
      %p179 = por %p177, %p178
      %p181 = scmp.ne.s32.totalorder %s164, %s180
      %p182 = scmp.eq.s32.totalorder %s25, 0
      %p183 = por %p181, %p182
      %p184 = scmp.le.s32.totalorder 1, %s19
      %p185 = scmp.lt.s32.totalorder %s19, 3
      %p186 = pnand %p184, %p185
      %p187 = pneg %p186
      // Predicated region
      $region9: #{tpu_custom_call.1} parent=5 // pred_check
        _
      $region10: #{tpu_custom_call.1} parent=5 // pred_check_branch
        %189 = sbr.rel (%p186) target = $region12
      $region11: #{tpu_custom_call.1} parent=5 // pred_region
        %s190 = ssub.s32 %s19, 1
        // Predicated region
        $region13: #{tpu_custom_call.1} parent=11 // pred_check
          %p191 = pneg %p66
        $region14: #{tpu_custom_call.1} parent=11 // pred_check_branch
          %193 = sbr.rel (%p191) target = $region16
        $region15: #{tpu_custom_call.1} parent=11 // pred_region
          _
        $region16: #{tpu_custom_call.1} parent=11 // pred_fallthru
          _
        // Predicated region
        $region17: #{tpu_custom_call.1} parent=11 // pred_check
          %p194 = pneg %p87
        $region18: #{tpu_custom_call.1} parent=11 // pred_check_branch
          %196 = sbr.rel (%p194) target = $region20
        $region19: #{tpu_custom_call.1} parent=11 // pred_region
          %198 = vsyncadd [#allocation6], 0
          %s199 = sshll.u32 %s2, 4
          %s200 = int_to_ptr.hbm [resolvable:$true] %s199
          %s201 = sshll.u32 [#allocation5], 4
          %s202 = int_to_ptr.vmem [resolvable:$true] %s201
          %207 = dma.hbm_to_vmem [thread:$0]  %s200, 2048, %s202, [#allocation6], 64, 64, 4
        $region20: #{tpu_custom_call.1} parent=11 // pred_fallthru
          _
        // Predicated region
        $region21: #{tpu_custom_call.1} parent=11 // pred_check
          %p208 = pneg %p108
        $region22: #{tpu_custom_call.1} parent=11 // pred_check_branch
          %210 = sbr.rel (%p208) target = $region24
        $region23: #{tpu_custom_call.1} parent=11 // pred_region
          _
        $region24: #{tpu_custom_call.1} parent=11 // pred_fallthru
          _
        // Predicated region
        $region25: #{tpu_custom_call.1} parent=11 // pred_check
          %p211 = pneg %p129
        $region26: #{tpu_custom_call.1} parent=11 // pred_check_branch
          %213 = sbr.rel (%p211) target = $region28
        $region27: #{tpu_custom_call.1} parent=11 // pred_region
          _
        $region28: #{tpu_custom_call.1} parent=11 // pred_fallthru
          _
        // Predicated region
        $region29: #{tpu_custom_call.1} parent=11 // pred_check
          %p214 = pneg %p150
        $region30: #{tpu_custom_call.1} parent=11 // pred_check_branch
          %216 = sbr.rel (%p214) target = $region32
        $region31: #{tpu_custom_call.1} parent=11 // pred_region
          _
        $region32: #{tpu_custom_call.1} parent=11 // pred_fallthru
          _
      $region12: #{tpu_custom_call.1} parent=5 // pred_fallthru
        _
      %p217 = scmp.lt.s32.totalorder %s19, 2
      // Predicated region
      $region33: #{tpu_custom_call.1} parent=5 // pred_check
        %p218 = pneg %p217
      $region34: #{tpu_custom_call.1} parent=5 // pred_check_branch
        %220 = sbr.rel (%p218) target = $region36
      $region35: #{tpu_custom_call.1} parent=5 // pred_region
        // Predicated region
        $region37: #{tpu_custom_call.1} parent=35 // pred_check
          %p221 = pneg %p39
        $region38: #{tpu_custom_call.1} parent=35 // pred_check_branch
          %223 = sbr.rel (%p221) target = $region40
        $region39: #{tpu_custom_call.1} parent=35 // pred_region
          %s224 = sand.u32 %s29, 1
          %s225 = scalar_lea.sflag [#allocation3], %s224
          %s226 = sand.u32 %s29, 1
          %s227 = smul.addr %s226, 8
          %s228 = scalar_lea.vmem [#allocation2], %s227
          %230 = vsyncadd %s225, 0
          %s231 = smul.addr %s19, 8
          %s232 = scalar_lea.hbm %s0, %s231
          %s234 = sshll.u32 %s232, 4
          %s235 = int_to_ptr.hbm [resolvable:$true] %s234
          %s236 = sshll.u32 %s228, 4
          %s237 = int_to_ptr.vmem [resolvable:$true] %s236
          %239 = dma.hbm_to_vmem [thread:$0]  %s235, 128, %s237, %s225
        $region40: #{tpu_custom_call.1} parent=35 // pred_fallthru
          _
      $region36: #{tpu_custom_call.1} parent=5 // pred_fallthru
        _
      %p240 = scmp.le.s32.totalorder 1, %s19
      %p241 = scmp.lt.s32.totalorder %s19, 3
      %p242 = pnand %p240, %p241
      %p243 = pneg %p242
      // Predicated region
      $region41: #{tpu_custom_call.1} parent=5 // pred_check
        _
      $region42: #{tpu_custom_call.1} parent=5 // pred_check_branch
        %245 = sbr.rel (%p242) target = $region44
      $region43: #{tpu_custom_call.1} parent=5 // pred_region
        %s246 = ssub.s32 %s19, 1
        %s247 = sand.u32 %s32, 1
        %s248 = scalar_lea.sflag [#allocation3], %s247
        %s249 = sand.u32 %s32, 1
        %s250 = smul.addr %s249, 8
        %s251 = scalar_lea.vmem [#allocation2], %s250
        // Predicated region
        $region45: #{tpu_custom_call.1} parent=43 // pred_check
          %p252 = pneg %p45
        $region46: #{tpu_custom_call.1} parent=43 // pred_check_branch
          %254 = sbr.rel (%p252) target = $region48
        $region47: #{tpu_custom_call.1} parent=43 // pred_region
          %256 = dma.done %s248, 128
        $region48: #{tpu_custom_call.1} parent=43 // pred_fallthru
          _
        // Predicated region
        $region49: #{tpu_custom_call.1} parent=43 // pred_check
          %p257 = pneg %p87
        $region50: #{tpu_custom_call.1} parent=43 // pred_check_branch
          %259 = sbr.rel (%p257) target = $region52
        $region51: #{tpu_custom_call.1} parent=43 // pred_region
          %261 = dma.done [#allocation6], 2048
        $region52: #{tpu_custom_call.1} parent=43 // pred_fallthru
          _
        %s262 = sand.u32 %s32, 1
        %s263 = scalar_lea.sflag [#allocation3], %s262
        %s264 = sand.u32 %s32, 1
        %s265 = smul.addr %s264, 8
        %s266 = scalar_lea.vmem [#allocation2], %s265
        %p267 = pneg %p45
        %p268 = pneg %p42
        %p269 = pneg %p66
        %p270 = pneg %p63
        %p271 = pneg %p87
        %p272 = pneg %p84
        %p273 = pneg %p108
        %p274 = pneg %p105
        %p275 = pneg %p129
        %p276 = pneg %p126
        %p277 = pneg %p150
        %p278 = pneg %p147
        %p279 = pneg %p176
        %p280 = pneg %p173
        %s281 = sand.u32 %s163, 1
        %s282 = scalar_lea.sflag [#allocation4], %s281
        %s283 = sand.u32 %s163, 1
        %s284 = smul.addr %s283, 8
        %s285 = scalar_lea.vmem [#allocation7], %s284
        %v287 = vld [vmem:[%s1] sm:$0xf]
        %v288 = vld [vmem:[%s1 + $0x4] sm:$0xf]
        %v289 = vld [vmem:[#allocation5] sm:$0xf]
        %v290 = vld [vmem:[#allocation5 + $0x4] sm:$0xf]
        %v291 = vld [vmem:[#allocation5 + $0x8] sm:$0xf]
        %v292 = vld [vmem:[#allocation5 + $0xc] sm:$0xf]
        %s293 = scalar_lea.vmem [#allocation5], 16
        %v294 = vld [vmem:[%s293] sm:$0xf]
        %v295 = vld [vmem:[%s293 + $0x4] sm:$0xf]
        %v296 = vld [vmem:[%s293 + $0x8] sm:$0xf]
        %v297 = vld [vmem:[%s293 + $0xc] sm:$0xf]
        %s298 = scalar_lea.vmem [#allocation5], 32
        %v299 = vld [vmem:[%s298] sm:$0xf]
        %v300 = vld [vmem:[%s298 + $0x4] sm:$0xf]
        %v301 = vld [vmem:[%s298 + $0x8] sm:$0xf]
        %v302 = vld [vmem:[%s298 + $0xc] sm:$0xf]
        %s303 = scalar_lea.vmem [#allocation5], 48
        %v304 = vld [vmem:[%s303] sm:$0xf]
        %v305 = vld [vmem:[%s303 + $0x4] sm:$0xf]
        %v306 = vld [vmem:[%s303 + $0x8] sm:$0xf]
        %v307 = vld [vmem:[%s303 + $0xc] sm:$0xf]
        %s308 = scalar_lea.vmem [#allocation5], 64
        %v309 = vld [vmem:[%s308] sm:$0xf]
        %v310 = vld [vmem:[%s308 + $0x4] sm:$0xf]
        %v311 = vld [vmem:[%s308 + $0x8] sm:$0xf]
        %v312 = vld [vmem:[%s308 + $0xc] sm:$0xf]
        %s313 = scalar_lea.vmem [#allocation5], 80
        %v314 = vld [vmem:[%s313] sm:$0xf]
        %v315 = vld [vmem:[%s313 + $0x4] sm:$0xf]
        %v316 = vld [vmem:[%s313 + $0x8] sm:$0xf]
        %v317 = vld [vmem:[%s313 + $0xc] sm:$0xf]
        %s318 = scalar_lea.vmem [#allocation5], 96
        %v319 = vld [vmem:[%s318] sm:$0xf]
        %v320 = vld [vmem:[%s318 + $0x4] sm:$0xf]
        %v321 = vld [vmem:[%s318 + $0x8] sm:$0xf]
        %v322 = vld [vmem:[%s318 + $0xc] sm:$0xf]
        %s323 = scalar_lea.vmem [#allocation5], 112
        %v324 = vld [vmem:[%s323] sm:$0xf]
        %v325 = vld [vmem:[%s323 + $0x4] sm:$0xf]
        %v326 = vld [vmem:[%s323 + $0x8] sm:$0xf]
        %v327 = vld [vmem:[%s323 + $0xc] sm:$0xf]
        %v328 = vld [vmem:[%s3] sm:$0x1]
        %v329 = vld [vmem:[%s4] sm:$0x1]
        %v330 = vld [vmem:[%s5] sm:$0x1]
        %v331 = vld [vmem:[%s251] sm:$0xff]
        %v332 = vpack.c.bf16 %v331, %v331
        %v335 = vunpack.c.l.b16 %v287
        %v336 = vunpack.c.l.b16 %v288
        %v337 = vpack.c.b16 %v336, %v335
        %vm338 = vcmask 64512
        %v340 = vsel %vm338, %v337, 0
        %vm342 = vcmask 1043456
        %v344 = vsel %vm342, %v332, 0
        %346 = vmatpush.bf16.msra.mxu0 0
        %347 = vmatpush.bf16.msra.mxu0 0
        %348 = vmatpush.bf16.msra.mxu0 0
        %349 = vmatpush.bf16.msra.mxu0 0
        %350 = vmatpush.bf16.msra.mxu0 0
        %351 = vmatpush.bf16.msra.mxu0 0
        %352 = vmatpush.bf16.msra.mxu0 0
        %353 = vmatpush.bf16.msra.mxu0 %v344
        %354 = vmatmul.bf16.gmra.mxu0 %v340
        %v355 = vpop.f32.mrf.mxu0
        %v356 = vadd.f32 0.0, %v355
        %v357 = vpop.f32.mrf.mxu0
        %v358 = vadd.f32 0.0, %v357
        %359 = vdwg.mxu0
        %v360 = vpack.c.bf16 %v356, %v356
        %v361 = vpack.c.bf16 %v358, %v358
        %v366 = vunpack.c.l.b16 %v299
        %v367 = vunpack.c.l.b16 %v300
        %v368 = vunpack.c.l.b16 %v301
        %v369 = vunpack.c.l.b16 %v302
        %v370 = vpack.c.b16 %v367, %v366
        %v371 = vpack.c.b16 %v369, %v368
        %vm374 = vcmask 261120
        %v375 = vsel %vm374, %v332, 0
        %377 = vmatpush.bf16.msra.mxu0 0
        %378 = vmatpush.bf16.msra.mxu0 0
        %379 = vmatpush.bf16.msra.mxu0 0
        %380 = vmatpush.bf16.msra.mxu0 0
        %381 = vmatpush.bf16.msra.mxu0 0
        %382 = vmatpush.bf16.msra.mxu0 0
        %383 = vmatpush.bf16.msra.mxu0 %v371
        %384 = vmatpush.bf16.msra.mxu0 %v370
        %385 = vmatmul.bf16.gmra.mxu0 %v375
        %v386 = vpop.f32.mrf.mxu0
        %v387 = vadd.f32 0.0, %v386
        %v388 = vpop.f32.mrf.mxu0
        %389 = vdwg.mxu0
        %v394 = vunpack.c.l.b16 %v294
        %v395 = vunpack.c.l.b16 %v295
        %v396 = vunpack.c.l.b16 %v296
        %v397 = vunpack.c.l.b16 %v297
        %v398 = vpack.c.b16 %v395, %v394
        %v399 = vpack.c.b16 %v397, %v396
        %v403 = vsel %vm374, %v361, 0
        %405 = vmatpush.bf16.msra.mxu0 0
        %406 = vmatpush.bf16.msra.mxu0 0
        %407 = vmatpush.bf16.msra.mxu0 0
        %408 = vmatpush.bf16.msra.mxu0 0
        %409 = vmatpush.bf16.msra.mxu0 0
        %410 = vmatpush.bf16.msra.mxu0 0
        %411 = vmatpush.bf16.msra.mxu0 %v399
        %412 = vmatpush.bf16.msra.mxu0 %v398
        %413 = vmatmul.bf16.gmra.mxu0 %v403
        %v414 = vpop.f32.mrf.mxu0
        %v415 = vadd.f32 0.0, %v414
        %v416 = vpop.f32.mrf.mxu0
        %417 = vdwg.mxu0
        %v422 = vunpack.c.l.b16 %v289
        %v423 = vunpack.c.l.b16 %v290
        %v424 = vunpack.c.l.b16 %v291
        %v425 = vunpack.c.l.b16 %v292
        %v426 = vpack.c.b16 %v423, %v422
        %v427 = vpack.c.b16 %v425, %v424
        %v431 = vsel %vm374, %v360, 0
        %433 = vmatpush.bf16.msra.mxu0 0
        %434 = vmatpush.bf16.msra.mxu0 0
        %435 = vmatpush.bf16.msra.mxu0 0
        %436 = vmatpush.bf16.msra.mxu0 0
        %437 = vmatpush.bf16.msra.mxu0 0
        %438 = vmatpush.bf16.msra.mxu0 0
        %439 = vmatpush.bf16.msra.mxu0 %v427
        %440 = vmatpush.bf16.msra.mxu0 %v426
        %441 = vmatmul.bf16.gmra.mxu0 %v431
        %v442 = vpop.f32.mrf.mxu0
        %v443 = vadd.f32 %v415, %v442
        %v444 = vpop.f32.mrf.mxu0
        %445 = vdwg.mxu0
        %v446 = vadd.f32 %v443, %v387
        %v448 = vperm.slane %v328, 0
        %v450 = vadd.f32 %v446, %v448
        %v455 = vunpack.c.l.b16 %v309
        %v456 = vunpack.c.l.b16 %v310
        %v457 = vunpack.c.l.b16 %v311
        %v458 = vunpack.c.l.b16 %v312
        %v459 = vpack.c.b16 %v456, %v455
        %v460 = vpack.c.b16 %v458, %v457
        %463 = vmatpush.bf16.msra.mxu0 0
        %464 = vmatpush.bf16.msra.mxu0 0
        %465 = vmatpush.bf16.msra.mxu0 0
        %466 = vmatpush.bf16.msra.mxu0 0
        %467 = vmatpush.bf16.msra.mxu0 0
        %468 = vmatpush.bf16.msra.mxu0 0
        %469 = vmatpush.bf16.msra.mxu0 %v460
        %470 = vmatpush.bf16.msra.mxu0 %v459
        %471 = vmatmul.bf16.gmra.mxu0 %v403
        %v472 = vpop.f32.mrf.mxu0
        %v473 = vadd.f32 0.0, %v472
        %v474 = vpop.f32.mrf.mxu0
        %475 = vdwg.mxu0
        %v480 = vunpack.c.l.b16 %v304
        %v481 = vunpack.c.l.b16 %v305
        %v482 = vunpack.c.l.b16 %v306
        %v483 = vunpack.c.l.b16 %v307
        %v484 = vpack.c.b16 %v481, %v480
        %v485 = vpack.c.b16 %v483, %v482
        %488 = vmatpush.bf16.msra.mxu0 0
        %489 = vmatpush.bf16.msra.mxu0 0
        %490 = vmatpush.bf16.msra.mxu0 0
        %491 = vmatpush.bf16.msra.mxu0 0
        %492 = vmatpush.bf16.msra.mxu0 0
        %493 = vmatpush.bf16.msra.mxu0 0
        %494 = vmatpush.bf16.msra.mxu0 %v485
        %495 = vmatpush.bf16.msra.mxu0 %v484
        %496 = vmatmul.bf16.gmra.mxu0 %v431
        %v497 = vpop.f32.mrf.mxu0
        %v498 = vadd.f32 %v473, %v497
        %v499 = vpop.f32.mrf.mxu0
        %500 = vdwg.mxu0
        %v501 = vadd.f32 %v498, %v387
        %v503 = vperm.slane %v329, 0
        %v505 = vadd.f32 %v501, %v503
        %v506 = vxor.u32 %v450, 2147483648
        %v507 = vmul.f32 %v506, 1.442695
        %v508 = vpow.pop %v507
        %v509 = vadd.f32 %v508, 1.0
        %v510 = vrcp.pop %v509
        %v511 = vmul.f32 %v509, %v510
        %v512 = vsub.f32 1.0, %v511
        %v513 = vmul.f32 %v510, %v512
        %v514 = vadd.f32 %v510, %v513
        %vm515 = vweird.f32 %v509
        %vm516 = vweird.f32 %v510
        %vm517 = vmor %vm515, %vm516
        %v518 = vsel %vm517, %v510, %v514
        %v519 = vand.u32 2147483647, %v509
        %vm520 = vcmp.eq.f32.partialorder %v519, 8.507059e+37
        %v521 = vand.u32 %v509, 2147483648
        %v522 = vor.u32 1.1754944e-38, %v521
        %v523 = vsel %vm520, %v522, %v518
        %v524 = vmul.f32 1.0, %v523
        %v525 = vxor.u32 %v505, 2147483648
        %v526 = vmul.f32 %v525, 1.442695
        %v527 = vpow.pop %v526
        %v528 = vadd.f32 %v527, 1.0
        %v529 = vrcp.pop %v528
        %v530 = vmul.f32 %v528, %v529
        %v531 = vsub.f32 1.0, %v530
        %v532 = vmul.f32 %v529, %v531
        %v533 = vadd.f32 %v529, %v532
        %vm534 = vweird.f32 %v528
        %vm535 = vweird.f32 %v529
        %vm536 = vmor %vm534, %vm535
        %v537 = vsel %vm536, %v529, %v533
        %v538 = vand.u32 2147483647, %v528
        %vm539 = vcmp.eq.f32.partialorder %v538, 8.507059e+37
        %v540 = vand.u32 %v528, 2147483648
        %v541 = vor.u32 1.1754944e-38, %v540
        %v542 = vsel %vm539, %v541, %v537
        %v543 = vmul.f32 1.0, %v542
        %v548 = vunpack.c.l.b16 %v319
        %v549 = vunpack.c.l.b16 %v320
        %v550 = vunpack.c.l.b16 %v321
        %v551 = vunpack.c.l.b16 %v322
        %v552 = vpack.c.b16 %v549, %v548
        %v553 = vpack.c.b16 %v551, %v550
        %556 = vmatpush.bf16.msra.mxu0 0
        %557 = vmatpush.bf16.msra.mxu0 0
        %558 = vmatpush.bf16.msra.mxu0 0
        %559 = vmatpush.bf16.msra.mxu0 0
        %560 = vmatpush.bf16.msra.mxu0 0
        %561 = vmatpush.bf16.msra.mxu0 0
        %562 = vmatpush.bf16.msra.mxu0 %v553
        %563 = vmatpush.bf16.msra.mxu0 %v552
        %564 = vmatmul.bf16.gmra.mxu0 %v403
        %v565 = vpop.f32.mrf.mxu0
        %v566 = vadd.f32 0.0, %v565
        %v567 = vpop.f32.mrf.mxu0
        %568 = vdwg.mxu0
        %v573 = vunpack.c.l.b16 %v314
        %v574 = vunpack.c.l.b16 %v315
        %v575 = vunpack.c.l.b16 %v316
        %v576 = vunpack.c.l.b16 %v317
        %v577 = vpack.c.b16 %v574, %v573
        %v578 = vpack.c.b16 %v576, %v575
        %581 = vmatpush.bf16.msra.mxu0 0
        %582 = vmatpush.bf16.msra.mxu0 0
        %583 = vmatpush.bf16.msra.mxu0 0
        %584 = vmatpush.bf16.msra.mxu0 0
        %585 = vmatpush.bf16.msra.mxu0 0
        %586 = vmatpush.bf16.msra.mxu0 0
        %587 = vmatpush.bf16.msra.mxu0 %v578
        %588 = vmatpush.bf16.msra.mxu0 %v577
        %589 = vmatmul.bf16.gmra.mxu0 %v431
        %v590 = vpop.f32.mrf.mxu0
        %v591 = vadd.f32 %v566, %v590
        %v592 = vpop.f32.mrf.mxu0
        %593 = vdwg.mxu0
        %v594 = vmul.f32 %v543, %v331
        %v595 = vpack.c.bf16 %v594, %v594
        %v600 = vunpack.c.l.b16 %v324
        %v601 = vunpack.c.l.b16 %v325
        %v602 = vunpack.c.l.b16 %v326
        %v603 = vunpack.c.l.b16 %v327
        %v604 = vpack.c.b16 %v601, %v600
        %v605 = vpack.c.b16 %v603, %v602
        %v609 = vsel %vm374, %v595, 0
        %611 = vmatpush.bf16.msra.mxu0 0
        %612 = vmatpush.bf16.msra.mxu0 0
        %613 = vmatpush.bf16.msra.mxu0 0
        %614 = vmatpush.bf16.msra.mxu0 0
        %615 = vmatpush.bf16.msra.mxu0 0
        %616 = vmatpush.bf16.msra.mxu0 0
        %617 = vmatpush.bf16.msra.mxu0 %v605
        %618 = vmatpush.bf16.msra.mxu0 %v604
        %619 = vmatmul.bf16.gmra.mxu0 %v609
        %v620 = vpop.f32.mrf.mxu0
        %v621 = vadd.f32 0.0, %v620
        %v622 = vpop.f32.mrf.mxu0
        %623 = vdwg.mxu0
        %v624 = vadd.f32 %v591, %v621
        %v626 = vperm.slane %v330, 0
        %v628 = vadd.f32 %v624, %v626
        %v629 = vtanh.pop %v628
        %v630 = vsub.f32 1.0, %v524
        %v631 = vmul.f32 %v630, %v331
        %v632 = vmul.f32 %v524, %v629
        %v633 = vadd.f32 %v631, %v632
        %v634 = vpack.c.bf16 %v633, %v633
        %v636 = vsel %vm342, %v634, 0
        %638 = vmatpush.bf16.msra.mxu0 0
        %639 = vmatpush.bf16.msra.mxu0 0
        %640 = vmatpush.bf16.msra.mxu0 0
        %641 = vmatpush.bf16.msra.mxu0 0
        %642 = vmatpush.bf16.msra.mxu0 0
        %643 = vmatpush.bf16.msra.mxu0 0
        %644 = vmatpush.bf16.msra.mxu0 0
        %645 = vmatpush.bf16.msra.mxu0 %v636
        %646 = vmatmul.bf16.gmra.mxu0 %v340
        %v647 = vpop.f32.mrf.mxu0
        %v648 = vadd.f32 0.0, %v647
        %v649 = vpop.f32.mrf.mxu0
        %v650 = vadd.f32 0.0, %v649
        %651 = vdwg.mxu0
        %v652 = vpack.c.bf16 %v648, %v648
        %v653 = vpack.c.bf16 %v650, %v650
        %v654 = vsel %vm374, %v634, 0
        %656 = vmatpush.bf16.msra.mxu0 0
        %657 = vmatpush.bf16.msra.mxu0 0
        %658 = vmatpush.bf16.msra.mxu0 0
        %659 = vmatpush.bf16.msra.mxu0 0
        %660 = vmatpush.bf16.msra.mxu0 0
        %661 = vmatpush.bf16.msra.mxu0 0
        %662 = vmatpush.bf16.msra.mxu0 %v371
        %663 = vmatpush.bf16.msra.mxu0 %v370
        %664 = vmatmul.bf16.gmra.mxu0 %v654
        %v665 = vpop.f32.mrf.mxu0
        %v666 = vadd.f32 0.0, %v665
        %v667 = vpop.f32.mrf.mxu0
        %668 = vdwg.mxu0
        %v670 = vsel %vm374, %v653, 0
        %672 = vmatpush.bf16.msra.mxu0 0
        %673 = vmatpush.bf16.msra.mxu0 0
        %674 = vmatpush.bf16.msra.mxu0 0
        %675 = vmatpush.bf16.msra.mxu0 0
        %676 = vmatpush.bf16.msra.mxu0 0
        %677 = vmatpush.bf16.msra.mxu0 0
        %678 = vmatpush.bf16.msra.mxu0 %v399
        %679 = vmatpush.bf16.msra.mxu0 %v398
        %680 = vmatmul.bf16.gmra.mxu0 %v670
        %v681 = vpop.f32.mrf.mxu0
        %v682 = vadd.f32 0.0, %v681
        %v683 = vpop.f32.mrf.mxu0
        %684 = vdwg.mxu0
        %v686 = vsel %vm374, %v652, 0
        %688 = vmatpush.bf16.msra.mxu0 0
        %689 = vmatpush.bf16.msra.mxu0 0
        %690 = vmatpush.bf16.msra.mxu0 0
        %691 = vmatpush.bf16.msra.mxu0 0
        %692 = vmatpush.bf16.msra.mxu0 0
        %693 = vmatpush.bf16.msra.mxu0 0
        %694 = vmatpush.bf16.msra.mxu0 %v427
        %695 = vmatpush.bf16.msra.mxu0 %v426
        %696 = vmatmul.bf16.gmra.mxu0 %v686
        %v697 = vpop.f32.mrf.mxu0
        %v698 = vadd.f32 %v682, %v697
        %v699 = vpop.f32.mrf.mxu0
        %700 = vdwg.mxu0
        %v701 = vadd.f32 %v698, %v666
        %v702 = vadd.f32 %v701, %v448
        %703 = vmatpush.bf16.msra.mxu0 0
        %704 = vmatpush.bf16.msra.mxu0 0
        %705 = vmatpush.bf16.msra.mxu0 0
        %706 = vmatpush.bf16.msra.mxu0 0
        %707 = vmatpush.bf16.msra.mxu0 0
        %708 = vmatpush.bf16.msra.mxu0 0
        %709 = vmatpush.bf16.msra.mxu0 %v460
        %710 = vmatpush.bf16.msra.mxu0 %v459
        %711 = vmatmul.bf16.gmra.mxu0 %v670
        %v712 = vpop.f32.mrf.mxu0
        %v713 = vadd.f32 0.0, %v712
        %v714 = vpop.f32.mrf.mxu0
        %715 = vdwg.mxu0
        %716 = vmatpush.bf16.msra.mxu0 0
        %717 = vmatpush.bf16.msra.mxu0 0
        %718 = vmatpush.bf16.msra.mxu0 0
        %719 = vmatpush.bf16.msra.mxu0 0
        %720 = vmatpush.bf16.msra.mxu0 0
        %721 = vmatpush.bf16.msra.mxu0 0
        %722 = vmatpush.bf16.msra.mxu0 %v485
        %723 = vmatpush.bf16.msra.mxu0 %v484
        %724 = vmatmul.bf16.gmra.mxu0 %v686
        %v725 = vpop.f32.mrf.mxu0
        %v726 = vadd.f32 %v713, %v725
        %v727 = vpop.f32.mrf.mxu0
        %728 = vdwg.mxu0
        %v729 = vadd.f32 %v726, %v666
        %v730 = vadd.f32 %v729, %v503
        %v731 = vxor.u32 %v702, 2147483648
        %v732 = vmul.f32 %v731, 1.442695
        %v733 = vpow.pop %v732
        %v734 = vadd.f32 %v733, 1.0
        %v735 = vrcp.pop %v734
        %v736 = vmul.f32 %v734, %v735
        %v737 = vsub.f32 1.0, %v736
        %v738 = vmul.f32 %v735, %v737
        %v739 = vadd.f32 %v735, %v738
        %vm740 = vweird.f32 %v734
        %vm741 = vweird.f32 %v735
        %vm742 = vmor %vm740, %vm741
        %v743 = vsel %vm742, %v735, %v739
        %v744 = vand.u32 2147483647, %v734
        %vm745 = vcmp.eq.f32.partialorder %v744, 8.507059e+37
        %v746 = vand.u32 %v734, 2147483648
        %v747 = vor.u32 1.1754944e-38, %v746
        %v748 = vsel %vm745, %v747, %v743
        %v749 = vmul.f32 1.0, %v748
        %v750 = vxor.u32 %v730, 2147483648
        %v751 = vmul.f32 %v750, 1.442695
        %v752 = vpow.pop %v751
        %v753 = vadd.f32 %v752, 1.0
        %v754 = vrcp.pop %v753
        %v755 = vmul.f32 %v753, %v754
        %v756 = vsub.f32 1.0, %v755
        %v757 = vmul.f32 %v754, %v756
        %v758 = vadd.f32 %v754, %v757
        %vm759 = vweird.f32 %v753
        %vm760 = vweird.f32 %v754
        %vm761 = vmor %vm759, %vm760
        %v762 = vsel %vm761, %v754, %v758
        %v763 = vand.u32 2147483647, %v753
        %vm764 = vcmp.eq.f32.partialorder %v763, 8.507059e+37
        %v765 = vand.u32 %v753, 2147483648
        %v766 = vor.u32 1.1754944e-38, %v765
        %v767 = vsel %vm764, %v766, %v762
        %v768 = vmul.f32 1.0, %v767
        %769 = vmatpush.bf16.msra.mxu0 0
        %770 = vmatpush.bf16.msra.mxu0 0
        %771 = vmatpush.bf16.msra.mxu0 0
        %772 = vmatpush.bf16.msra.mxu0 0
        %773 = vmatpush.bf16.msra.mxu0 0
        %774 = vmatpush.bf16.msra.mxu0 0
        %775 = vmatpush.bf16.msra.mxu0 %v553
        %776 = vmatpush.bf16.msra.mxu0 %v552
        %777 = vmatmul.bf16.gmra.mxu0 %v670
        %v778 = vpop.f32.mrf.mxu0
        %v779 = vadd.f32 0.0, %v778
        %v780 = vpop.f32.mrf.mxu0
        %781 = vdwg.mxu0
        %782 = vmatpush.bf16.msra.mxu0 0
        %783 = vmatpush.bf16.msra.mxu0 0
        %784 = vmatpush.bf16.msra.mxu0 0
        %785 = vmatpush.bf16.msra.mxu0 0
        %786 = vmatpush.bf16.msra.mxu0 0
        %787 = vmatpush.bf16.msra.mxu0 0
        %788 = vmatpush.bf16.msra.mxu0 %v578
        %789 = vmatpush.bf16.msra.mxu0 %v577
        %790 = vmatmul.bf16.gmra.mxu0 %v686
        %v791 = vpop.f32.mrf.mxu0
        %v792 = vadd.f32 %v779, %v791
        %v793 = vpop.f32.mrf.mxu0
        %794 = vdwg.mxu0
        %v795 = vmul.f32 %v768, %v633
        %v796 = vpack.c.bf16 %v795, %v795
        %v798 = vsel %vm374, %v796, 0
        %800 = vmatpush.bf16.msra.mxu0 0
        %801 = vmatpush.bf16.msra.mxu0 0
        %802 = vmatpush.bf16.msra.mxu0 0
        %803 = vmatpush.bf16.msra.mxu0 0
        %804 = vmatpush.bf16.msra.mxu0 0
        %805 = vmatpush.bf16.msra.mxu0 0
        %806 = vmatpush.bf16.msra.mxu0 %v605
        %807 = vmatpush.bf16.msra.mxu0 %v604
        %808 = vmatmul.bf16.gmra.mxu0 %v798
        %v809 = vpop.f32.mrf.mxu0
        %v810 = vadd.f32 0.0, %v809
        %v811 = vpop.f32.mrf.mxu0
        %812 = vdwg.mxu0
        %v813 = vadd.f32 %v792, %v810
        %v814 = vadd.f32 %v813, %v626
        %v815 = vtanh.pop %v814
        %v816 = vsub.f32 1.0, %v749
        %v817 = vmul.f32 %v816, %v633
        %v818 = vmul.f32 %v749, %v815
        %v819 = vadd.f32 %v817, %v818
        %v820 = vpack.c.bf16 %v819, %v819
        %v822 = vsel %vm342, %v820, 0
        %824 = vmatpush.bf16.msra.mxu0 0
        %825 = vmatpush.bf16.msra.mxu0 0
        %826 = vmatpush.bf16.msra.mxu0 0
        %827 = vmatpush.bf16.msra.mxu0 0
        %828 = vmatpush.bf16.msra.mxu0 0
        %829 = vmatpush.bf16.msra.mxu0 0
        %830 = vmatpush.bf16.msra.mxu0 0
        %831 = vmatpush.bf16.msra.mxu0 %v822
        %832 = vmatmul.bf16.gmra.mxu0 %v340
        %v833 = vpop.f32.mrf.mxu0
        %v834 = vadd.f32 0.0, %v833
        %v835 = vpop.f32.mrf.mxu0
        %v836 = vadd.f32 0.0, %v835
        %837 = vdwg.mxu0
        %v838 = vpack.c.bf16 %v834, %v834
        %v839 = vpack.c.bf16 %v836, %v836
        %v840 = vsel %vm374, %v820, 0
        %842 = vmatpush.bf16.msra.mxu0 0
        %843 = vmatpush.bf16.msra.mxu0 0
        %844 = vmatpush.bf16.msra.mxu0 0
        %845 = vmatpush.bf16.msra.mxu0 0
        %846 = vmatpush.bf16.msra.mxu0 0
        %847 = vmatpush.bf16.msra.mxu0 0
        %848 = vmatpush.bf16.msra.mxu0 %v371
        %849 = vmatpush.bf16.msra.mxu0 %v370
        %850 = vmatmul.bf16.gmra.mxu0 %v840
        %v851 = vpop.f32.mrf.mxu0
        %v852 = vadd.f32 0.0, %v851
        %v853 = vpop.f32.mrf.mxu0
        %854 = vdwg.mxu0
        %v856 = vsel %vm374, %v839, 0
        %858 = vmatpush.bf16.msra.mxu0 0
        %859 = vmatpush.bf16.msra.mxu0 0
        %860 = vmatpush.bf16.msra.mxu0 0
        %861 = vmatpush.bf16.msra.mxu0 0
        %862 = vmatpush.bf16.msra.mxu0 0
        %863 = vmatpush.bf16.msra.mxu0 0
        %864 = vmatpush.bf16.msra.mxu0 %v399
        %865 = vmatpush.bf16.msra.mxu0 %v398
        %866 = vmatmul.bf16.gmra.mxu0 %v856
        %v867 = vpop.f32.mrf.mxu0
        %v868 = vadd.f32 0.0, %v867
        %v869 = vpop.f32.mrf.mxu0
        %870 = vdwg.mxu0
        %v872 = vsel %vm374, %v838, 0
        %874 = vmatpush.bf16.msra.mxu0 0
        %875 = vmatpush.bf16.msra.mxu0 0
        %876 = vmatpush.bf16.msra.mxu0 0
        %877 = vmatpush.bf16.msra.mxu0 0
        %878 = vmatpush.bf16.msra.mxu0 0
        %879 = vmatpush.bf16.msra.mxu0 0
        %880 = vmatpush.bf16.msra.mxu0 %v427
        %881 = vmatpush.bf16.msra.mxu0 %v426
        %882 = vmatmul.bf16.gmra.mxu0 %v872
        %v883 = vpop.f32.mrf.mxu0
        %v884 = vadd.f32 %v868, %v883
        %v885 = vpop.f32.mrf.mxu0
        %886 = vdwg.mxu0
        %v887 = vadd.f32 %v884, %v852
        %v888 = vadd.f32 %v887, %v448
        %889 = vmatpush.bf16.msra.mxu0 0
        %890 = vmatpush.bf16.msra.mxu0 0
        %891 = vmatpush.bf16.msra.mxu0 0
        %892 = vmatpush.bf16.msra.mxu0 0
        %893 = vmatpush.bf16.msra.mxu0 0
        %894 = vmatpush.bf16.msra.mxu0 0
        %895 = vmatpush.bf16.msra.mxu0 %v460
        %896 = vmatpush.bf16.msra.mxu0 %v459
        %897 = vmatmul.bf16.gmra.mxu0 %v856
        %v898 = vpop.f32.mrf.mxu0
        %v899 = vadd.f32 0.0, %v898
        %v900 = vpop.f32.mrf.mxu0
        %901 = vdwg.mxu0
        %902 = vmatpush.bf16.msra.mxu0 0
        %903 = vmatpush.bf16.msra.mxu0 0
        %904 = vmatpush.bf16.msra.mxu0 0
        %905 = vmatpush.bf16.msra.mxu0 0
        %906 = vmatpush.bf16.msra.mxu0 0
        %907 = vmatpush.bf16.msra.mxu0 0
        %908 = vmatpush.bf16.msra.mxu0 %v485
        %909 = vmatpush.bf16.msra.mxu0 %v484
        %910 = vmatmul.bf16.gmra.mxu0 %v872
        %v911 = vpop.f32.mrf.mxu0
        %v912 = vadd.f32 %v899, %v911
        %v913 = vpop.f32.mrf.mxu0
        %914 = vdwg.mxu0
        %v915 = vadd.f32 %v912, %v852
        %v916 = vadd.f32 %v915, %v503
        %v917 = vxor.u32 %v888, 2147483648
        %v918 = vmul.f32 %v917, 1.442695
        %v919 = vpow.pop %v918
        %v920 = vadd.f32 %v919, 1.0
        %v921 = vrcp.pop %v920
        %v922 = vmul.f32 %v920, %v921
        %v923 = vsub.f32 1.0, %v922
        %v924 = vmul.f32 %v921, %v923
        %v925 = vadd.f32 %v921, %v924
        %vm926 = vweird.f32 %v920
        %vm927 = vweird.f32 %v921
        %vm928 = vmor %vm926, %vm927
        %v929 = vsel %vm928, %v921, %v925
        %v930 = vand.u32 2147483647, %v920
        %vm931 = vcmp.eq.f32.partialorder %v930, 8.507059e+37
        %v932 = vand.u32 %v920, 2147483648
        %v933 = vor.u32 1.1754944e-38, %v932
        %v934 = vsel %vm931, %v933, %v929
        %v935 = vmul.f32 1.0, %v934
        %v936 = vxor.u32 %v916, 2147483648
        %v937 = vmul.f32 %v936, 1.442695
        %v938 = vpow.pop %v937
        %v939 = vadd.f32 %v938, 1.0
        %v940 = vrcp.pop %v939
        %v941 = vmul.f32 %v939, %v940
        %v942 = vsub.f32 1.0, %v941
        %v943 = vmul.f32 %v940, %v942
        %v944 = vadd.f32 %v940, %v943
        %vm945 = vweird.f32 %v939
        %vm946 = vweird.f32 %v940
        %vm947 = vmor %vm945, %vm946
        %v948 = vsel %vm947, %v940, %v944
        %v949 = vand.u32 2147483647, %v939
        %vm950 = vcmp.eq.f32.partialorder %v949, 8.507059e+37
        %v951 = vand.u32 %v939, 2147483648
        %v952 = vor.u32 1.1754944e-38, %v951
        %v953 = vsel %vm950, %v952, %v948
        %v954 = vmul.f32 1.0, %v953
        %955 = vmatpush.bf16.msra.mxu0 0
        %956 = vmatpush.bf16.msra.mxu0 0
        %957 = vmatpush.bf16.msra.mxu0 0
        %958 = vmatpush.bf16.msra.mxu0 0
        %959 = vmatpush.bf16.msra.mxu0 0
        %960 = vmatpush.bf16.msra.mxu0 0
        %961 = vmatpush.bf16.msra.mxu0 %v553
        %962 = vmatpush.bf16.msra.mxu0 %v552
        %963 = vmatmul.bf16.gmra.mxu0 %v856
        %v964 = vpop.f32.mrf.mxu0
        %v965 = vadd.f32 0.0, %v964
        %v966 = vpop.f32.mrf.mxu0
        %967 = vdwg.mxu0
        %968 = vmatpush.bf16.msra.mxu0 0
        %969 = vmatpush.bf16.msra.mxu0 0
        %970 = vmatpush.bf16.msra.mxu0 0
        %971 = vmatpush.bf16.msra.mxu0 0
        %972 = vmatpush.bf16.msra.mxu0 0
        %973 = vmatpush.bf16.msra.mxu0 0
        %974 = vmatpush.bf16.msra.mxu0 %v578
        %975 = vmatpush.bf16.msra.mxu0 %v577
        %976 = vmatmul.bf16.gmra.mxu0 %v872
        %v977 = vpop.f32.mrf.mxu0
        %v978 = vadd.f32 %v965, %v977
        %v979 = vpop.f32.mrf.mxu0
        %980 = vdwg.mxu0
        %v981 = vmul.f32 %v954, %v819
        %v982 = vpack.c.bf16 %v981, %v981
        %v984 = vsel %vm374, %v982, 0
        %986 = vmatpush.bf16.msra.mxu0 0
        %987 = vmatpush.bf16.msra.mxu0 0
        %988 = vmatpush.bf16.msra.mxu0 0
        %989 = vmatpush.bf16.msra.mxu0 0
        %990 = vmatpush.bf16.msra.mxu0 0
        %991 = vmatpush.bf16.msra.mxu0 0
        %992 = vmatpush.bf16.msra.mxu0 %v605
        %993 = vmatpush.bf16.msra.mxu0 %v604
        %994 = vmatmul.bf16.gmra.mxu0 %v984
        %v995 = vpop.f32.mrf.mxu0
        %v996 = vadd.f32 0.0, %v995
        %v997 = vpop.f32.mrf.mxu0
        %998 = vdwg.mxu0
        %v999 = vadd.f32 %v978, %v996
        %v1000 = vadd.f32 %v999, %v626
        %v1001 = vtanh.pop %v1000
        %v1002 = vsub.f32 1.0, %v935
        %v1003 = vmul.f32 %v1002, %v819
        %v1004 = vmul.f32 %v935, %v1001
        %v1005 = vadd.f32 %v1003, %v1004
        %1006 = vst.msk [vmem:[%s285] sm:$0xff] %vm374, %v1005
        %s1007 = sand.u32 %s163, 1
        %s1008 = scalar_lea.sflag [#allocation4], %s1007
        %s1009 = sand.u32 %s163, 1
        %s1010 = smul.addr %s1009, 8
        %s1011 = scalar_lea.vmem [#allocation7], %s1010
        // Predicated region
        $region53: #{tpu_custom_call.1} parent=43 // pred_check
          %p1012 = pneg %p173
        $region54: #{tpu_custom_call.1} parent=43 // pred_check_branch
          %1014 = sbr.rel (%p1012) target = $region56
        $region55: #{tpu_custom_call.1} parent=43 // pred_region
          %1016 = vsyncadd %s1008, 0
          %s1017 = smul.addr %s24, 8
          %s1018 = scalar_lea.hbm %s6, %s1017
          %s1020 = sshll.u32 %s1011, 4
          %s1021 = int_to_ptr.vmem [resolvable:$true] %s1020
          %s1022 = sshll.u32 %s1018, 4
          %s1023 = int_to_ptr.hbm [resolvable:$true] %s1022
          %1025 = dma.vmem_to_hbm [thread:$0]  %s1021, 128, %s1023, %s1008
        $region56: #{tpu_custom_call.1} parent=43 // pred_fallthru
          _
      $region44: #{tpu_custom_call.1} parent=5 // pred_fallthru
        _
      %p1026 = scmp.le.s32.totalorder 2, %s19
      // Predicated region
      $region57: #{tpu_custom_call.1} parent=5 // pred_check
        %p1027 = pneg %p1026
      $region58: #{tpu_custom_call.1} parent=5 // pred_check_branch
        %1029 = sbr.rel (%p1027) target = $region60
      $region59: #{tpu_custom_call.1} parent=5 // pred_region
        %s1030 = ssub.s32 %s19, 2
        // Predicated region
        $region61: #{tpu_custom_call.1} parent=59 // pred_check
          %p1031 = pneg %p179
        $region62: #{tpu_custom_call.1} parent=59 // pred_check_branch
          %1033 = sbr.rel (%p1031) target = $region64
        $region63: #{tpu_custom_call.1} parent=59 // pred_region
          %s1034 = sand.u32 %s164, 1
          %s1035 = scalar_lea.sflag [#allocation4], %s1034
          %s1036 = sand.u32 %s164, 1
          %s1037 = smul.addr %s1036, 8
          %s1038 = scalar_lea.vmem [#allocation7], %s1037
          %1040 = dma.done %s1035, 128
        $region64: #{tpu_custom_call.1} parent=59 // pred_fallthru
          _
      $region60: #{tpu_custom_call.1} parent=5 // pred_fallthru
        _
    $region6: #{tpu_custom_call.1} parent=1 // loop_footer
      %s23 = sadd.s32 1, %s19
    $region7: #{tpu_custom_call.1} parent=1 // loop_footer_branch
      %18 = sbr.rel target = $region3
    $region8: #{tpu_custom_call.1} parent=1 // loop_exit
      _
    %1041 = vsyncpa [#allocation3], 1
    %s1042 = scalar_lea.sflag [#allocation3], 1
    %1043 = vsyncpa %s1042, 1
    %1044 = vsyncpa [#allocation6], 1
    %1045 = vsyncpa [#allocation4], 1
    %s1046 = scalar_lea.sflag [#allocation4], 1
    %1047 = vsyncpa %s1046, 1

</llo_original>
